<compile_context>
chip_gen: v7x
topology: tpu7x:2x2x1
jax: 0.10.0
libtpu: 0.0.40
codegen_flags: <defaults>
</compile_context>

<pallas_src>
import jax
import jax.numpy as jnp
from jax.experimental import pallas as pl
from jax.experimental.pallas import tpu as pltpu

EPS = 1e-5
_INV_SQRT2 = 0.7071067811865476


# ----------------------------- kernels --------------------------------------

def _stats_kernel(x_ref, sum_ref, sq_ref):
    # x_ref:   (R, L)   rows = flattened (n, c), lanes = HW tile
    # sum_ref: (R, 128) per-row per-lane running partial sum   (resident across j)
    # sq_ref:  (R, 128) per-row per-lane running partial sum of squares
    @pl.when(pl.program_id(1) == 0)
    def _():
        sum_ref[...] = jnp.zeros_like(sum_ref)
        sq_ref[...] = jnp.zeros_like(sq_ref)

    x = x_ref[...].astype(jnp.float32)                   # (R, L)
    n_chunks = x.shape[1] // 128
    # Lane-partial accumulation: static 128-aligned lane slices -> pure VPU adds,
    # no cross-lane reduce in the hot loop.
    c0 = x[:, 0:128]
    acc_s = c0
    acc_q = c0 * c0
    for k in range(1, n_chunks):
        ck = x[:, k * 128:(k + 1) * 128]
        acc_s = acc_s + ck
        acc_q = acc_q + ck * ck
    sum_ref[...] += acc_s
    sq_ref[...] += acc_q


def _norm_gelu_kernel(a_ref, b_ref, x_ref, o_ref):
    # a_ref, b_ref: (R, 1)  per-row scale/shift with 1/sqrt(2) already folded in
    # x_ref, o_ref: (R, L)
    x = x_ref[...].astype(jnp.float32)
    z = x * a_ref[...] + b_ref[...]                      # z = (gamma*(x-mean)/std + beta)/sqrt(2)
    # Exact GELU (PyTorch nn.GELU default): 0.5*y*(1+erf(y/sqrt(2))) with y = sqrt(2)*z.
    # TODO(synk): on v7x (VALU-bound erf) a tanh/EUP-based GELU would be faster but is
    # not bit-equivalent to the exact erf form, so it is not used here.
    out = _INV_SQRT2 * z * (1.0 + jax.lax.erf(z))
    o_ref[...] = out.astype(o_ref.dtype)


# ----------------------------- tiling helpers --------------------------------

def _round_up(n, m):
    return ((n + m - 1) // m) * m


def _largest_aligned_divisor(n, base, cap):
    # Largest multiple of `base` that divides n and is <= cap (n is a multiple of base).
    best = base
    k = base
    limit = min(n, cap)
    while k <= limit:
        if n % k == 0:
            best = k
        k += base
    return best


def _pick_tiles(nc_pad, hw_pad, budget_elems=(1 << 19)):
    # ~2 MiB of f32 per block buffer (4 double-buffered buffers in pass 2 -> ~8 MiB,
    # safe under v5e's 16 MiB scoped-VMEM default and v7x's 32 MiB).
    # Lane tile capped at 4096 to bound the unrolled chunk loop in the stats kernel;
    # the row tile then grows to fill the budget.
    L = _largest_aligned_divisor(hw_pad, 128, min(4096, budget_elems))
    max_r = max(8, budget_elems // L)
    R = _largest_aligned_divisor(nc_pad, 8, max_r)
    return R, L


# ----------------------------- wrapper ---------------------------------------

def bngelu(x_nchw, gamma, beta, eps=EPS):
    """x_nchw: (N, C, H, W); gamma, beta: (C,). Returns GELU(BatchNorm2d(x))."""
    N, C, H, W = x_nchw.shape
    HW = H * W
    NC = N * C
    M = N * HW                                            # per-channel sample count

    x2 = x_nchw.reshape(NC, HW)                           # free view of NCHW

    NC_pad = _round_up(NC, 8)
    HW_pad = _round_up(HW, 128)
    padded = (NC_pad, HW_pad) != (NC, HW)
    if padded:
        # Zero padding: contributes nothing to sum / sum-of-squares; output sliced away.
        x2 = jnp.pad(x2, ((0, NC_pad - NC), (0, HW_pad - HW)))

    R, L = _pick_tiles(NC_pad, HW_pad)
    grid = (NC_pad // R, HW_pad // L)

    # ---- Pass 1: streaming per-row lane-partial sum / sum-of-squares ----------
    s_rows, q_rows = pl.pallas_call(
        _stats_kernel,
        out_shape=(jax.ShapeDtypeStruct((NC_pad, 128), jnp.float32),
                   jax.ShapeDtypeStruct((NC_pad, 128), jnp.float32)),
        grid_spec=pltpu.PrefetchScalarGridSpec(
            num_scalar_prefetch=0,
            grid=grid,
            in_specs=[pl.BlockSpec((R, L), lambda i, j: (i, j))],
            out_specs=(pl.BlockSpec((R, 128), lambda i, j: (i, 0)),
                       pl.BlockSpec((R, 128), lambda i, j: (i, 0))),
        ),
        compiler_params=pltpu.CompilerParams(
            dimension_semantics=("parallel", "arbitrary")),
    )(x2)

    # ---- Tiny per-channel epilogue in plain JAX -------------------------------
    sum_c = s_rows[:NC].reshape(N, C, 128).sum(axis=(0, 2))
    sq_c = q_rows[:NC].reshape(N, C, 128).sum(axis=(0, 2))
    mean = sum_c / M
    var = jnp.maximum(sq_c / M - mean * mean, 0.0)        # biased (training) variance, clamped
    inv_std = jax.lax.rsqrt(var + eps)
    a_c = gamma.astype(jnp.float32) * inv_std             # per-channel scale
    b_c = beta.astype(jnp.float32) - mean * a_c           # per-channel shift
    # Fold 1/sqrt(2) into the per-row scale/shift (rows are (n, c) with c minor).
    a_rows = jnp.tile(a_c * _INV_SQRT2, N).reshape(NC, 1)
    b_rows = jnp.tile(b_c * _INV_SQRT2, N).reshape(NC, 1)
    if NC_pad != NC:
        a_rows = jnp.pad(a_rows, ((0, NC_pad - NC), (0, 0)))
        b_rows = jnp.pad(b_rows, ((0, NC_pad - NC), (0, 0)))

    # ---- Pass 2: normalize (single FMA) + exact erf-GELU -----------------------
    out2 = pl.pallas_call(
        _norm_gelu_kernel,
        out_shape=jax.ShapeDtypeStruct((NC_pad, HW_pad), x_nchw.dtype),
        grid_spec=pltpu.PrefetchScalarGridSpec(
            num_scalar_prefetch=0,
            grid=grid,
            in_specs=[pl.BlockSpec((R, 1), lambda i, j: (i, 0)),
                      pl.BlockSpec((R, 1), lambda i, j: (i, 0)),
                      pl.BlockSpec((R, L), lambda i, j: (i, j))],
            out_specs=pl.BlockSpec((R, L), lambda i, j: (i, j)),
        ),
        compiler_params=pltpu.CompilerParams(
            dimension_semantics=("parallel", "parallel")),
    )(a_rows, b_rows, x2)

    if padded:
        out2 = out2[:NC, :HW]
    return out2.reshape(N, C, H, W)


# ----------------------------- reference & test ------------------------------

def _reference(x_nchw, gamma, beta):
    x = x_nchw.astype(jnp.float32)
    mean = jnp.mean(x, axis=(0, 2, 3), keepdims=True)
    var = jnp.mean((x - mean) ** 2, axis=(0, 2, 3), keepdims=True)
    xhat = (x - mean) * jax.lax.rsqrt(var + EPS)
    y = xhat * gamma.reshape(1, -1, 1, 1) + beta.reshape(1, -1, 1, 1)
    return jax.nn.gelu(y, approximate=False).astype(x_nchw.dtype)


if __name__ == "__main__":
    key = jax.random.PRNGKey(0)
    kx, kg, kb = jax.random.split(key, 3)

    N, C, H, W = 2, 4, 16, 16
    x = jax.random.normal(kx, (N, C, H, W), dtype=jnp.float32)
    # nn.BatchNorm2d init is weight=1, bias=0; use nontrivial deterministic values instead.
    gamma = 1.0 + 0.1 * jax.random.normal(kg, (C,), dtype=jnp.float32)
    beta = 0.1 * jax.random.normal(kb, (C,), dtype=jnp.float32)

    out = jax.block_until_ready(bngelu(x, gamma, beta))
    ref = _reference(x, gamma, beta)

    assert out.shape == (N, C, H, W)
    assert jnp.allclose(out, ref, atol=1e-4, rtol=1e-4), float(jnp.max(jnp.abs(out - ref)))
    print("KERNEL_OK")
</pallas_src>

<mosaic_0001>
module attributes {stable_mosaic.version = 11 : i64} {
  func.func @_stats_kernel(%arg0: i32, %arg1: i32, %arg2: memref<8x256xf32, #tpu.memory_space<vmem>>, %arg3: memref<8x128xf32, #tpu.memory_space<vmem>>, %arg4: memref<8x128xf32, #tpu.memory_space<vmem>>) attributes {dimension_semantics = [#tpu.dimension_semantics<parallel>, #tpu.dimension_semantics<arbitrary>], iteration_bounds = array<i64: 1, 1>, scalar_prefetch = 0 : i64, scratch_operands = 0 : i64, tpu.core_type = #tpu.core_type<tc>, window_params = [{transform_indices = @transform_0, window_bounds = array<i64: 8, 256>}, {transform_indices = @transform_1, window_bounds = array<i64: 8, 128>}, {transform_indices = @transform_2, window_bounds = array<i64: 8, 128>}]} {
    %c0_i32 = arith.constant 0 : i32
    %0 = arith.cmpi eq, %arg1, %c0_i32 : i32
    %1 = arith.extui %0 : i1 to i32
    %c0_i32_0 = arith.constant 0 : i32
    %2 = arith.cmpi ne, %1, %c0_i32_0 : i32
    scf.if %2 {
      %cst = arith.constant 0.000000e+00 : f32
      %16 = vector.broadcast %cst : f32 to vector<8x128xf32>
      %c0_10 = arith.constant 0 : index
      %c0_11 = arith.constant 0 : index
      %17 = vector.load %arg3[%c0_10, %c0_11] : memref<8x128xf32, #tpu.memory_space<vmem>>, vector<8x128xf32>
      tpu.vector_store %arg3[%c0_10, %c0_11], %16 {strides = array<i32>} : memref<8x128xf32, #tpu.memory_space<vmem>>, vector<8x128xf32>,
      %cst_12 = arith.constant 0.000000e+00 : f32
      %18 = vector.broadcast %cst_12 : f32 to vector<8x128xf32>
      %c0_13 = arith.constant 0 : index
      %c0_14 = arith.constant 0 : index
      %19 = vector.load %arg4[%c0_13, %c0_14] : memref<8x128xf32, #tpu.memory_space<vmem>>, vector<8x128xf32>
      tpu.vector_store %arg4[%c0_13, %c0_14], %18 {strides = array<i32>} : memref<8x128xf32, #tpu.memory_space<vmem>>, vector<8x128xf32>,
    } else {
    }
    %c0 = arith.constant 0 : index
    %c0_1 = arith.constant 0 : index
    %3 = vector.load %arg2[%c0, %c0_1] : memref<8x256xf32, #tpu.memory_space<vmem>>, vector<8x256xf32>
    %4 = vector.extract_strided_slice %3 {offsets = [0, 0], sizes = [8, 128], strides = [1, 1]} : vector<8x256xf32> to vector<8x128xf32>
    %5 = arith.mulf %4, %4 : vector<8x128xf32>
    %6 = vector.extract_strided_slice %3 {offsets = [0, 128], sizes = [8, 128], strides = [1, 1]} : vector<8x256xf32> to vector<8x128xf32>
    %7 = arith.addf %4, %6 : vector<8x128xf32>
    %8 = arith.mulf %6, %6 : vector<8x128xf32>
    %9 = arith.addf %5, %8 : vector<8x128xf32>
    %c0_2 = arith.constant 0 : index
    %c0_3 = arith.constant 0 : index
    %10 = vector.load %arg3[%c0_2, %c0_3] : memref<8x128xf32, #tpu.memory_space<vmem>>, vector<8x128xf32>
    %11 = arith.addf %10, %7 : vector<8x128xf32>
    %c0_4 = arith.constant 0 : index
    %c0_5 = arith.constant 0 : index
    %12 = vector.load %arg3[%c0_4, %c0_5] : memref<8x128xf32, #tpu.memory_space<vmem>>, vector<8x128xf32>
    tpu.vector_store %arg3[%c0_4, %c0_5], %11 {strides = array<i32>} : memref<8x128xf32, #tpu.memory_space<vmem>>, vector<8x128xf32>,
    %c0_6 = arith.constant 0 : index
    %c0_7 = arith.constant 0 : index
    %13 = vector.load %arg4[%c0_6, %c0_7] : memref<8x128xf32, #tpu.memory_space<vmem>>, vector<8x128xf32>
    %14 = arith.addf %13, %9 : vector<8x128xf32>
    %c0_8 = arith.constant 0 : index
    %c0_9 = arith.constant 0 : index
    %15 = vector.load %arg4[%c0_8, %c0_9] : memref<8x128xf32, #tpu.memory_space<vmem>>, vector<8x128xf32>
    tpu.vector_store %arg4[%c0_8, %c0_9], %14 {strides = array<i32>} : memref<8x128xf32, #tpu.memory_space<vmem>>, vector<8x128xf32>,
    return
  }
  func.func @transform_0(%arg0: i32, %arg1: i32) -> (i32, i32) {
    %c0_i32 = arith.constant 0 : i32
    return %arg0, %arg1 : i32, i32
  }
  func.func @transform_1(%arg0: i32, %arg1: i32) -> (i32, i32) {
    %c0_i32 = arith.constant 0 : i32
    %c0_i32_0 = arith.constant 0 : i32
    return %arg0, %c0_i32 : i32, i32
  }
  func.func @transform_2(%arg0: i32, %arg1: i32) -> (i32, i32) {
    %c0_i32 = arith.constant 0 : i32
    %c0_i32_0 = arith.constant 0 : i32
    return %arg0, %c0_i32 : i32, i32
  }
}

</mosaic_0001>

<llo_original>
// kernel: tpu_custom_call.1
$region0: #{tpu_custom_call.1}
  #allocation0 [shape = 'u32[]', space=smem, size = 0x4, offset = 0x4, fixed_abs, tag = 'smem constant byte address 0x4 - core index']
  #allocation1 [shape = 'u32[144,128]{1,0:T(1,128)}', space=vmem, size = 0x12000, scoped, tag = 'internal scratch']
  %s0 = inlined_call_operand.hbm [shape: f32[8,256], index: 0, kind: input, shape index: {}]
  %s1 = inlined_call_operand.hbm [shape: f32[8,128], index: 1, kind: output, shape index: {0}]
  %s2 = inlined_call_operand.hbm [shape: f32[8,128], index: 2, kind: output, shape index: {1}]
  %3 = xla_tuple %s1, %s2
  %s4 = sld [smem:[#allocation0]]
  $region30: #{tpu_custom_call.1} parent=0
    _
  %s6 = ssub.s32 1, %s4
  %s7 = scalar_select 0, %s6, %s4
  $region1: #{tpu_custom_call.1} parent=0
    #allocation2 [shape = 'u8[8192]{0}', space=vmem, size = 0x2000, scoped, tag = 'input window, operand 0, single buffered']
    #allocation3 [shape = 's32[1]{0}', space=sflag, size = 0x4, scoped, tag = 'scoped memory for tpu_custom_call.1']
    #allocation4 [shape = 's32[1]{0}', space=sflag, size = 0x4, scoped, tag = 'scoped memory for tpu_custom_call.1']
    #allocation5 [shape = 'u8[4096]{0}', space=vmem, size = 0x1000, scoped, tag = 'output window, operand 0, single buffered']
    #allocation6 [shape = 'u8[4096]{0}', space=vmem, size = 0x1000, scoped, tag = 'output window, operand 1, single buffered']
    #allocation7 [shape = 's32[1]{0}', space=sflag, size = 0x4, scoped, tag = 'scoped memory for tpu_custom_call.1']
    %8 = vsyncpa [#allocation3], 0
    %9 = vsyncpa [#allocation4], 0
    %10 = vsyncpa [#allocation7], 0
    // Predicated region
    $region2: #{tpu_custom_call.1} parent=1 // pred_check
      _
    $region3: #{tpu_custom_call.1} parent=1 // pred_check_branch
      %12 = sbr.rel (0) target = $region5
    $region4: #{tpu_custom_call.1} parent=1 // pred_region
      %s14 = ssub.s32 256, 256
      %15 = vsyncadd [#allocation3], %s14
      %s17 = sshll.u32 [#allocation2], 4
      %s18 = int_to_ptr.vmem [resolvable:$true] %s17
      %20 = dma.hbm_to_vmem [thread:$0]  %s0, 256, %s18, [#allocation3]
    $region5: #{tpu_custom_call.1} parent=1 // pred_fallthru
      _
    // Predicated region
    $region6: #{tpu_custom_call.1} parent=1 // pred_check
      _
    $region7: #{tpu_custom_call.1} parent=1 // pred_check_branch
      %22 = sbr.rel (0) target = $region9
    $region8: #{tpu_custom_call.1} parent=1 // pred_region
      %23 = dma.done [#allocation3], 256
    $region9: #{tpu_custom_call.1} parent=1 // pred_fallthru
      _
    %p24 = scmp.eq.s32.totalorder 0, 0
    // Predicated region
    $region10: #{tpu_custom_call.1} parent=1 // pred_check
      %p25 = pneg %p24
    $region11: #{tpu_custom_call.1} parent=1 // pred_check_branch
      %27 = sbr.rel (%p25) target = $region13
    $region12: #{tpu_custom_call.1} parent=1 // pred_region
      %28 = vst [vmem:[#allocation5] sm:$0xff] 0.0
      %29 = vst [vmem:[#allocation6] sm:$0xff] 0.0
    $region13: #{tpu_custom_call.1} parent=1 // pred_fallthru
      _
    %v30 = vld [vmem:[#allocation2] sm:$0xff]
    %v31 = vld [vmem:[#allocation2 + $0x8] sm:$0xff]
    %v32 = vmul.f32 %v30, %v30
    %v33 = vadd.f32 %v30, %v31
    %v34 = vmul.f32 %v31, %v31
    %v35 = vadd.f32 %v32, %v34
    %v36 = vld [vmem:[#allocation5] sm:$0xff]
    %v37 = vadd.f32 %v36, %v33
    %38 = vst [vmem:[#allocation5] sm:$0xff] %v37
    %v39 = vld [vmem:[#allocation6] sm:$0xff]
    %v40 = vadd.f32 %v39, %v35
    %41 = vst [vmem:[#allocation6] sm:$0xff] %v40
    // Predicated region
    $region14: #{tpu_custom_call.1} parent=1 // pred_check
      _
    $region15: #{tpu_custom_call.1} parent=1 // pred_check_branch
      %43 = sbr.rel (0) target = $region17
    $region16: #{tpu_custom_call.1} parent=1 // pred_region
      %s45 = ssub.s32 128, 128
      %46 = vsyncadd [#allocation4], %s45
      %s48 = sshll.u32 [#allocation5], 4
      %s49 = int_to_ptr.vmem [resolvable:$true] %s48
      %51 = dma.vmem_to_hbm [thread:$0]  %s49, 128, %s1, [#allocation4]
    $region17: #{tpu_custom_call.1} parent=1 // pred_fallthru
      _
    // Predicated region
    $region18: #{tpu_custom_call.1} parent=1 // pred_check
      _
    $region19: #{tpu_custom_call.1} parent=1 // pred_check_branch
      %53 = sbr.rel (0) target = $region21
    $region20: #{tpu_custom_call.1} parent=1 // pred_region
      %s55 = ssub.s32 128, 128
      %56 = vsyncadd [#allocation7], %s55
      %s58 = sshll.u32 [#allocation6], 4
      %s59 = int_to_ptr.vmem [resolvable:$true] %s58
      %61 = dma.vmem_to_hbm [thread:$0]  %s59, 128, %s2, [#allocation7]
    $region21: #{tpu_custom_call.1} parent=1 // pred_fallthru
      _
    // Predicated region
    $region22: #{tpu_custom_call.1} parent=1 // pred_check
      _
    $region23: #{tpu_custom_call.1} parent=1 // pred_check_branch
      %63 = sbr.rel (0) target = $region25
    $region24: #{tpu_custom_call.1} parent=1 // pred_region
      %64 = dma.done [#allocation4], 128
    $region25: #{tpu_custom_call.1} parent=1 // pred_fallthru
      _
    // Predicated region
    $region26: #{tpu_custom_call.1} parent=1 // pred_check
      _
    $region27: #{tpu_custom_call.1} parent=1 // pred_check_branch
      %66 = sbr.rel (0) target = $region29
    $region28: #{tpu_custom_call.1} parent=1 // pred_region
      %67 = dma.done [#allocation7], 128
    $region29: #{tpu_custom_call.1} parent=1 // pred_fallthru
      _
    %68 = vsyncpa [#allocation3], 1
    %69 = vsyncpa [#allocation4], 1
    %70 = vsyncpa [#allocation7], 1

</llo_original>
